<compile_context>
chip_gen: v5e
topology: v5e:2x2
jax: 0.10.0
libtpu: 0.0.40
codegen_flags: <defaults>
</compile_context>

<pallas_src>
import functools

import jax
import jax.numpy as jnp
from jax.experimental import pallas as pl
from jax.experimental.pallas import tpu as pltpu


def _round_up(x, m):
    return (x + m - 1) // m * m


def _vmem_limit_bytes():
    """Generation-aware scoped-VMEM limit to pass to the Mosaic compiler."""
    cap = None
    try:
        info = pltpu.get_tpu_info()
        cap = getattr(info, "vmem_capacity_bytes", None)
    except Exception:
        cap = None
    if not cap:
        cap = 64 * 1024 * 1024  # conservative fallback: v7x physical per-TC VMEM
    # ~75% of physical (v5e/v6e 128 MiB -> 96 MiB, v7x 64 MiB -> 48 MiB),
    # never below the 16 MiB v5e default so tiny shapes compile everywhere.
    return int(max(16 * 1024 * 1024, min(int(cap * 0.75), 100 * 1024 * 1024)))


def _pick_tile_f(batch_size, num_features, vmem_limit):
    """Lane-dense feature tile sized for multi-MiB per-step DMA payloads."""
    B = max(int(batch_size), 1)
    F128 = _round_up(num_features, 128)

    # Per-feature-column VMEM cost of the pipelined blocks (f32):
    #   x tile  : 2 buffers * B * 4 bytes
    #   out tile: 2 buffers * B * 4 bytes
    #   nrm/nrv : 2 outputs * 2 buffers * 4 bytes
    bytes_per_col = 16 * B + 16
    # Resident (grid-invariant) parameter/stat rows: 4 inputs * 2 buffers * 4B.
    rows_bytes = 32 * F128

    # Leave headroom under the scoped-VMEM limit for compiler scratch.
    usable = int(vmem_limit * 0.7)

    # Hard feasibility check at the minimum (128-wide) tile.
    min_cost = bytes_per_col * 128 + 32 * F128
    if min_cost > usable:
        # TODO(synk): batch-tiled two-pass scheme for very large batch sizes.
        raise ValueError(
            f"batch_size={batch_size} too large for a (B, 128) feature tile "
            f"within the VMEM budget ({vmem_limit} bytes); needs a batch-tiled "
            f"two-pass kernel.")

    # Budget-based cap (conservative: rows may round up by at most one tile).
    tf_budget = max(128, (usable - rows_bytes) // (bytes_per_col + 32))

    # Per-step DMA payload target (~8 MiB of double-buffered x+out): measured
    # ~85% of HBM roofline vs ~30% for tiny tiles dominated by ~0.35us/step.
    target_payload = 8 * 1024 * 1024
    tf_target = max(128, target_payload // bytes_per_col)

    tile_f = min(tf_target, tf_budget, F128)

    # v7x has 2 TensorCores: keep >=2 feature tiles when F allows it so the
    # "parallel" grid axis can be split across them (no-op on 1-TC chips).
    if F128 >= 256:
        tile_f = min(tile_f, F128 // 2)

    tile_f = max(128, (tile_f // 128) * 128)
    return tile_f


def _bn_train_kernel(momentum, eps, inv_nm1, tile_f,
                     x_ref, w_ref, b_ref, rm_ref, rv_ref,
                     out_ref, nrm_ref, nrv_ref):
    # Parameter / running-stat rows are VMEM-resident (full padded row);
    # slice out this tile's columns.
    f0 = pl.multiple_of(pl.program_id(0) * tile_f, 128)
    cols = pl.ds(f0, tile_f)
    w = w_ref[:, cols]
    b = b_ref[:, cols]
    rm = rm_ref[:, cols]
    rv = rv_ref[:, cols]

    x = x_ref[...]                                     # (B, TILE_F)

    # Two-pass stats: mean, then unbiased variance (matches torch.std).
    mean = jnp.mean(x, axis=0, keepdims=True)          # (1, TILE_F)
    diff = x - mean
    var_unbiased = jnp.sum(diff * diff, axis=0, keepdims=True) * inv_nm1

    tmp_mean = momentum * mean + (1.0 - momentum) * rm
    tmp_var = momentum * var_unbiased + (1.0 - momentum) * rv

    nrm_ref[...] = tmp_mean
    nrv_ref[...] = tmp_var

    # Fold the divide into a per-feature scale/shift: reciprocal lives on the
    # (1, TILE_F) row (EUP approx + one Newton step -> f32 accuracy), and the
    # (B, TILE_F) work is a single mul+add per element.
    d = tmp_var + eps
    inv = pl.reciprocal(d, approx=True)
    inv = inv * (2.0 - d * inv)                        # Newton refinement
    scale = w * inv
    shift = b - scale * tmp_mean
    out_ref[...] = x * scale + shift


def _bn_eval_kernel(eps, tile_f, x_ref, w_ref, b_ref, rm_ref, rv_ref, out_ref):
    f0 = pl.multiple_of(pl.program_id(0) * tile_f, 128)
    cols = pl.ds(f0, tile_f)
    d = rv_ref[:, cols] + eps
    inv = pl.reciprocal(d, approx=True)
    inv = inv * (2.0 - d * inv)
    scale = w_ref[:, cols] * inv
    shift = b_ref[:, cols] - scale * rm_ref[:, cols]
    out_ref[...] = x_ref[...] * scale + shift


def new_batchnorm1d_forward(x, weight, bias, running_mean, running_var,
                            *, momentum=0.9, eps=1e-5, training=True):
    """x: (B, F) f32; weight/bias/running_*: (1, F) f32.

    Returns (out, new_running_mean, new_running_var) in training mode,
    (out, running_mean, running_var) in eval mode.
    """
    B, F = x.shape
    if training and B < 2:
        raise ValueError("training mode needs batch_size >= 2 (unbiased std), "
                         "as in torch.std")

    vmem_limit = _vmem_limit_bytes()
    tile_f = _pick_tile_f(B, F, vmem_limit)
    n_tiles = pl.cdiv(F, tile_f)
    fp_rows = n_tiles * tile_f

    # Pad only the tiny (1, F) rows so they can stay resident and be sliced
    # with a static-size pl.ds; x / out stay unpadded (partial tail block).
    weight_p, bias_p = weight, bias
    rm_p, rv_p = running_mean, running_var
    if fp_rows != F:
        padc = fp_rows - F
        weight_p = jnp.pad(weight, ((0, 0), (0, padc)))
        bias_p = jnp.pad(bias, ((0, 0), (0, padc)))
        rm_p = jnp.pad(running_mean, ((0, 0), (0, padc)))
        # pad running_var with 1 so the padded-column reciprocal stays finite
        rv_p = jnp.pad(running_var, ((0, 0), (0, padc)), constant_values=1.0)

    grid = (n_tiles,)
    x_spec = pl.BlockSpec((B, tile_f), lambda i: (0, i))
    # Resident rows: constant block index -> fetched into VMEM once.
    row_res_spec = pl.BlockSpec((1, fp_rows), lambda i: (0, 0))
    stat_out_spec = pl.BlockSpec((1, tile_f), lambda i: (0, i))

    cparams = pltpu.CompilerParams(
        dimension_semantics=("parallel",),
        vmem_limit_bytes=vmem_limit,
    )
    # TODO(synk): if a v7x trace shows exposed DMA at 3.2 TB/s HBM, sweep
    # pipeline_mode=pl.Buffered(3) on x_spec / out_spec.

    if training:
        cost = pl.CostEstimate(
            flops=int(8 * B * F),
            transcendentals=0,
            bytes_accessed=int(4 * (2 * B * F + 8 * F)),
        )
        kernel = functools.partial(_bn_train_kernel, float(momentum),
                                   float(eps), 1.0 / float(B - 1), tile_f)
        out, nrm, nrv = pl.pallas_call(
            kernel,
            grid=grid,
            out_shape=(
                jax.ShapeDtypeStruct((B, F), x.dtype),
                jax.ShapeDtypeStruct((1, fp_rows), x.dtype),
                jax.ShapeDtypeStruct((1, fp_rows), x.dtype),
            ),
            in_specs=[x_spec, row_res_spec, row_res_spec,
                      row_res_spec, row_res_spec],
            out_specs=(x_spec, stat_out_spec, stat_out_spec),
            # running_mean -> new_running_mean, running_var -> new_running_var
            input_output_aliases={3: 1, 4: 2},
            compiler_params=cparams,
            cost_estimate=cost,
        )(x, weight_p, bias_p, rm_p, rv_p)
        if fp_rows != F:
            nrm = nrm[:, :F]
            nrv = nrv[:, :F]
        return out, nrm, nrv
    else:
        cost = pl.CostEstimate(
            flops=int(2 * B * F),
            transcendentals=0,
            bytes_accessed=int(4 * (2 * B * F + 4 * F)),
        )
        kernel = functools.partial(_bn_eval_kernel, float(eps), tile_f)
        out = pl.pallas_call(
            kernel,
            grid=grid,
            out_shape=jax.ShapeDtypeStruct((B, F), x.dtype),
            in_specs=[x_spec, row_res_spec, row_res_spec,
                      row_res_spec, row_res_spec],
            out_specs=x_spec,
            compiler_params=cparams,
            cost_estimate=cost,
        )(x, weight_p, bias_p, rm_p, rv_p)
        return out, running_mean, running_var


def _reference_train(x, weight, bias, running_mean, running_var, momentum, eps):
    """Plain-JAX mirror of the PyTorch training-mode forward (SD measure)."""
    B = x.shape[0]
    mean = jnp.mean(x, axis=0, keepdims=True)
    std = jnp.sqrt(jnp.sum((x - mean) ** 2, axis=0, keepdims=True) / (B - 1))
    tmp_mean = momentum * mean + (1 - momentum) * running_mean
    tmp_var = momentum * std * std + (1 - momentum) * running_var
    out = weight * (x - tmp_mean) / (tmp_var + eps) + bias
    return out, tmp_mean, tmp_var


if __name__ == "__main__":
    batch_size = 8
    # Not a multiple of 128: exercises the partial feature-tail block, the
    # >=2-tile split, and the padded resident parameter rows.
    num_features = 320
    momentum = 0.9
    eps = 1e-5

    key = jax.random.PRNGKey(0)
    x = jax.random.normal(key, (batch_size, num_features), dtype=jnp.float32)

    # Deterministic parameter init, matching reset_parameters():
    weight = jnp.full((1, num_features), 0.1, dtype=jnp.float32)   # fill_(0.1)
    bias = jnp.zeros((1, num_features), dtype=jnp.float32)         # zero_()
    running_mean_0 = jnp.zeros((1, num_features), dtype=jnp.float32)
    running_var_0 = jnp.ones((1, num_features), dtype=jnp.float32)

    # Reference computed first (the kernel aliases padded row copies).
    ref_out, ref_rm, ref_rv = _reference_train(
        x, weight, bias, running_mean_0, running_var_0, momentum, eps)

    out, new_rm, new_rv = new_batchnorm1d_forward(
        x, weight, bias, running_mean_0, running_var_0,
        momentum=momentum, eps=eps, training=True)
    jax.block_until_ready((out, new_rm, new_rv))

    assert out.shape == (batch_size, num_features)
    assert new_rm.shape == (1, num_features)
    assert new_rv.shape == (1, num_features)
    assert jnp.allclose(out, ref_out, atol=1e-5, rtol=1e-5)
    assert jnp.allclose(new_rm, ref_rm, atol=1e-5, rtol=1e-5)
    assert jnp.allclose(new_rv, ref_rv, atol=1e-5, rtol=1e-5)

    # Eval path: uses running stats directly, no update.
    out_eval, _, _ = new_batchnorm1d_forward(
        x, weight, bias, new_rm, new_rv,
        momentum=momentum, eps=eps, training=False)
    jax.block_until_ready(out_eval)
    eval_ref = weight * (x - new_rm) / (new_rv + eps) + bias
    assert jnp.allclose(out_eval, eval_ref, atol=1e-5, rtol=1e-5)

    print("KERNEL_OK")
</pallas_src>

<mosaic_0001>
module attributes {stable_mosaic.version = 11 : i64} {
  func.func @_bn_train_kernel(%arg0: i32, %arg1: memref<8x128xf32, #tpu.memory_space<vmem>>, %arg2: memref<1x384xf32, #tpu.memory_space<vmem>>, %arg3: memref<1x384xf32, #tpu.memory_space<vmem>>, %arg4: memref<1x384xf32, #tpu.memory_space<vmem>>, %arg5: memref<1x384xf32, #tpu.memory_space<vmem>>, %arg6: memref<8x128xf32, #tpu.memory_space<vmem>>, %arg7: memref<1x128xf32, #tpu.memory_space<vmem>>, %arg8: memref<1x128xf32, #tpu.memory_space<vmem>>) attributes {dimension_semantics = [#tpu.dimension_semantics<parallel>], iteration_bounds = array<i64: 3>, scalar_prefetch = 0 : i64, scratch_operands = 0 : i64, tpu.core_type = #tpu.core_type<tc>, window_params = [{transform_indices = @transform_0, window_bounds = array<i64: 8, 128>}, {pipeline_mode = #tpu.pipeline_mode<synchronous>, transform_indices = @transform_1, window_bounds = array<i64: 1, 384>}, {pipeline_mode = #tpu.pipeline_mode<synchronous>, transform_indices = @transform_2, window_bounds = array<i64: 1, 384>}, {pipeline_mode = #tpu.pipeline_mode<synchronous>, transform_indices = @transform_3, window_bounds = array<i64: 1, 384>}, {pipeline_mode = #tpu.pipeline_mode<synchronous>, transform_indices = @transform_4, window_bounds = array<i64: 1, 384>}, {transform_indices = @transform_5, window_bounds = array<i64: 8, 128>}, {transform_indices = @transform_6, window_bounds = array<i64: 1, 128>}, {transform_indices = @transform_7, window_bounds = array<i64: 1, 128>}]} {
    %c128_i32 = arith.constant 128 : i32
    %0 = arith.muli %arg0, %c128_i32 : i32
    %1 = tpu.assume_multiple %0, 128 : i32
    %c0 = arith.constant 0 : index
    %2 = arith.index_cast %1 : i32 to index
    %3 = vector.load %arg2[%c0, %2] : memref<1x384xf32, #tpu.memory_space<vmem>>, vector<1x128xf32>
    %c0_0 = arith.constant 0 : index
    %4 = arith.index_cast %1 : i32 to index
    %5 = vector.load %arg3[%c0_0, %4] : memref<1x384xf32, #tpu.memory_space<vmem>>, vector<1x128xf32>
    %c0_1 = arith.constant 0 : index
    %6 = arith.index_cast %1 : i32 to index
    %7 = vector.load %arg4[%c0_1, %6] : memref<1x384xf32, #tpu.memory_space<vmem>>, vector<1x128xf32>
    %c0_2 = arith.constant 0 : index
    %8 = arith.index_cast %1 : i32 to index
    %9 = vector.load %arg5[%c0_2, %8] : memref<1x384xf32, #tpu.memory_space<vmem>>, vector<1x128xf32>
    %c0_3 = arith.constant 0 : index
    %c0_4 = arith.constant 0 : index
    %10 = vector.load %arg1[%c0_3, %c0_4] : memref<8x128xf32, #tpu.memory_space<vmem>>, vector<8x128xf32>
    %cst = arith.constant dense<0.000000e+00> : vector<128xf32>
    %11 = vector.multi_reduction <add>, %10, %cst [0] : vector<8x128xf32> to vector<128xf32>
    %12 = vector.shape_cast %11 : vector<128xf32> to vector<1x128xf32>
    %cst_5 = arith.constant 8.000000e+00 : f32
    %13 = vector.broadcast %cst_5 : f32 to vector<1x128xf32>
    %14 = arith.divf %12, %13 : vector<1x128xf32>
    %15 = vector.broadcast %14 : vector<1x128xf32> to vector<8x128xf32>
    %16 = arith.subf %10, %15 : vector<8x128xf32>
    %17 = arith.mulf %16, %16 : vector<8x128xf32>
    %cst_6 = arith.constant dense<0.000000e+00> : vector<128xf32>
    %18 = vector.multi_reduction <add>, %17, %cst_6 [0] : vector<8x128xf32> to vector<128xf32>
    %19 = vector.shape_cast %18 : vector<128xf32> to vector<1x128xf32>
    %cst_7 = arith.constant 0.142857149 : f32
    %20 = vector.broadcast %cst_7 : f32 to vector<1x128xf32>
    %21 = arith.mulf %19, %20 : vector<1x128xf32>
    %cst_8 = arith.constant 0.899999976 : f32
    %22 = vector.broadcast %cst_8 : f32 to vector<1x128xf32>
    %23 = arith.mulf %22, %14 : vector<1x128xf32>
    %cst_9 = arith.constant 1.000000e-01 : f32
    %24 = vector.broadcast %cst_9 : f32 to vector<1x128xf32>
    %25 = arith.mulf %24, %7 : vector<1x128xf32>
    %26 = arith.addf %23, %25 : vector<1x128xf32>
    %cst_10 = arith.constant 0.899999976 : f32
    %27 = vector.broadcast %cst_10 : f32 to vector<1x128xf32>
    %28 = arith.mulf %27, %21 : vector<1x128xf32>
    %cst_11 = arith.constant 1.000000e-01 : f32
    %29 = vector.broadcast %cst_11 : f32 to vector<1x128xf32>
    %30 = arith.mulf %29, %9 : vector<1x128xf32>
    %31 = arith.addf %28, %30 : vector<1x128xf32>
    %c0_12 = arith.constant 0 : index
    %c0_13 = arith.constant 0 : index
    %32 = vector.load %arg7[%c0_12, %c0_13] : memref<1x128xf32, #tpu.memory_space<vmem>>, vector<1x128xf32>
    tpu.vector_store %arg7[%c0_12, %c0_13], %26 {strides = array<i32>} : memref<1x128xf32, #tpu.memory_space<vmem>>, vector<1x128xf32>,
    %c0_14 = arith.constant 0 : index
    %c0_15 = arith.constant 0 : index
    %33 = vector.load %arg8[%c0_14, %c0_15] : memref<1x128xf32, #tpu.memory_space<vmem>>, vector<1x128xf32>
    tpu.vector_store %arg8[%c0_14, %c0_15], %31 {strides = array<i32>} : memref<1x128xf32, #tpu.memory_space<vmem>>, vector<1x128xf32>,
    %cst_16 = arith.constant 9.99999974E-6 : f32
    %34 = vector.broadcast %cst_16 : f32 to vector<1x128xf32>
    %35 = arith.addf %31, %34 : vector<1x128xf32>
    %36 = tpu.reciprocal %35 {approx = true} : vector<1x128xf32> -> vector<1x128xf32>
    %37 = arith.mulf %35, %36 : vector<1x128xf32>
    %cst_17 = arith.constant 2.000000e+00 : f32
    %38 = vector.broadcast %cst_17 : f32 to vector<1x128xf32>
    %39 = arith.subf %38, %37 : vector<1x128xf32>
    %40 = arith.mulf %36, %39 : vector<1x128xf32>
    %41 = arith.mulf %3, %40 : vector<1x128xf32>
    %42 = arith.mulf %41, %26 : vector<1x128xf32>
    %43 = arith.subf %5, %42 : vector<1x128xf32>
    %44 = vector.broadcast %41 : vector<1x128xf32> to vector<8x128xf32>
    %45 = arith.mulf %10, %44 : vector<8x128xf32>
    %46 = vector.broadcast %43 : vector<1x128xf32> to vector<8x128xf32>
    %47 = arith.addf %45, %46 : vector<8x128xf32>
    %c0_18 = arith.constant 0 : index
    %c0_19 = arith.constant 0 : index
    %48 = vector.load %arg6[%c0_18, %c0_19] : memref<8x128xf32, #tpu.memory_space<vmem>>, vector<8x128xf32>
    tpu.vector_store %arg6[%c0_18, %c0_19], %47 {strides = array<i32>} : memref<8x128xf32, #tpu.memory_space<vmem>>, vector<8x128xf32>,
    return
  }
  func.func @transform_0(%arg0: i32) -> (i32, i32) {
    %c0_i32 = arith.constant 0 : i32
    %c0_i32_0 = arith.constant 0 : i32
    return %c0_i32, %arg0 : i32, i32
  }
  func.func @transform_1(%arg0: i32) -> (i32, i32) {
    %c0_i32 = arith.constant 0 : i32
    %c0_i32_0 = arith.constant 0 : i32
    %c0_i32_1 = arith.constant 0 : i32
    return %c0_i32, %c0_i32_0 : i32, i32
  }
  func.func @transform_2(%arg0: i32) -> (i32, i32) {
    %c0_i32 = arith.constant 0 : i32
    %c0_i32_0 = arith.constant 0 : i32
    %c0_i32_1 = arith.constant 0 : i32
    return %c0_i32, %c0_i32_0 : i32, i32
  }
  func.func @transform_3(%arg0: i32) -> (i32, i32) {
    %c0_i32 = arith.constant 0 : i32
    %c0_i32_0 = arith.constant 0 : i32
    %c0_i32_1 = arith.constant 0 : i32
    return %c0_i32, %c0_i32_0 : i32, i32
  }
  func.func @transform_4(%arg0: i32) -> (i32, i32) {
    %c0_i32 = arith.constant 0 : i32
    %c0_i32_0 = arith.constant 0 : i32
    %c0_i32_1 = arith.constant 0 : i32
    return %c0_i32, %c0_i32_0 : i32, i32
  }
  func.func @transform_5(%arg0: i32) -> (i32, i32) {
    %c0_i32 = arith.constant 0 : i32
    %c0_i32_0 = arith.constant 0 : i32
    return %c0_i32, %arg0 : i32, i32
  }
  func.func @transform_6(%arg0: i32) -> (i32, i32) {
    %c0_i32 = arith.constant 0 : i32
    %c0_i32_0 = arith.constant 0 : i32
    return %c0_i32, %arg0 : i32, i32
  }
  func.func @transform_7(%arg0: i32) -> (i32, i32) {
    %c0_i32 = arith.constant 0 : i32
    %c0_i32_0 = arith.constant 0 : i32
    return %c0_i32, %arg0 : i32, i32
  }
}

</mosaic_0001>

<llo_original>
// kernel: tpu_custom_call.1
$region0: #{tpu_custom_call.1}
  #allocation0 [shape = 'u32[]', space=smem, size = 0x4, offset = 0x4, fixed_abs, tag = 'smem constant byte address 0x4 - core index']
  #allocation1 [shape = 'u32[72,128]{1,0:T(1,128)}', space=vmem, size = 0x9000, scoped, tag = 'internal scratch']
  %s0 = inlined_call_operand.hbm [shape: f32[8,320], index: 0, kind: input, shape index: {}]
  %s1 = inlined_call_operand.vmem [shape: f32[1,384], index: 1, kind: input, shape index: {}]
  %s2 = inlined_call_operand.vmem [shape: f32[1,384], index: 2, kind: input, shape index: {}]
  %s3 = inlined_call_operand.hbm [shape: f32[1,384], index: 3, kind: input, shape index: {}, may-alias: {3,6}]
  %s4 = inlined_call_operand.hbm [shape: f32[1,384], index: 4, kind: input, shape index: {}, may-alias: {4,7}]
  %s5 = inlined_call_operand.hbm [shape: f32[8,320], index: 5, kind: output, shape index: {0}]
  %s6 = inlined_call_operand.hbm [shape: f32[1,384], index: 6, kind: output, shape index: {1}, may-alias: {3,6}]
  %s7 = inlined_call_operand.hbm [shape: f32[1,384], index: 7, kind: output, shape index: {2}, may-alias: {4,7}]
  %8 = xla_tuple %s5, %s6, %s7
  %s9 = sld [smem:[#allocation0]]
  $region81: #{tpu_custom_call.1} parent=0
    _
  %s11 = ssub.s32 1, %s9
  %s12 = scalar_select 0, %s11, %s9
  $region1: #{tpu_custom_call.1} parent=0
    #allocation2 [shape = 'u8[8192]{0}', space=vmem, size = 0x2000, scoped, tag = 'input window, operand 0']
    #allocation3 [shape = 's32[2]{0}', space=sflag, size = 0x8, scoped, tag = 'scoped memory for tpu_custom_call.1']
    #allocation4 [shape = 's32[2]{0}', space=sflag, size = 0x8, scoped, tag = 'scoped memory for tpu_custom_call.1']
    #allocation5 [shape = 'u8[1536]{0}', space=vmem, size = 0x800, scoped, tag = 'input window, operand 3, single buffered']
    #allocation6 [shape = 's32[1]{0}', space=sflag, size = 0x4, scoped, tag = 'scoped memory for tpu_custom_call.1']
    #allocation7 [shape = 'u8[1536]{0}', space=vmem, size = 0x800, scoped, tag = 'input window, operand 4, single buffered']
    #allocation8 [shape = 'u8[8192]{0}', space=vmem, size = 0x2000, scoped, tag = 'output window, operand 0']
    #allocation9 [shape = 'u8[1024]{0}', space=vmem, size = 0x400, scoped, tag = 'output window, operand 1']
    #allocation10 [shape = 's32[2]{0}', space=sflag, size = 0x8, scoped, tag = 'scoped memory for tpu_custom_call.1']
    #allocation11 [shape = 'u8[1024]{0}', space=vmem, size = 0x400, scoped, tag = 'output window, operand 2']
    %13 = vsyncpa [#allocation3], 0
    %s14 = scalar_lea.sflag [#allocation3], 1
    %15 = vsyncpa %s14, 0
    %16 = vsyncpa [#allocation6], 0
    %17 = vsyncpa [#allocation4], 0
    %s18 = scalar_lea.sflag [#allocation4], 1
    %19 = vsyncpa %s18, 0
    %20 = vsyncpa [#allocation10], 0
    %s21 = scalar_lea.sflag [#allocation10], 1
    %22 = vsyncpa %s21, 0
    loop: start=0, step=1, limit=5
    $region2: #{tpu_custom_call.1} parent=1 // loop_pre_header
      _
    $region3: #{tpu_custom_call.1} parent=1 // loop_header
      %s24 = sphi 0, %s28
      %p25 = scmp.ge.s32.totalorder %s24, 5
      %s34 = sphi 0, %s36
      %s37 = sphi 0, %s34
      %s38 = sphi 0, %s37
      %s54 = sphi 0, %s38
      %s58 = sphi 0, %s58
      %s60 = sphi 0, %s58
      %s61 = sphi 0, %s60
      %s75 = sphi 0, %s61
      %s79 = sphi 0, %s79
      %s81 = sphi 0, %s79
      %s82 = sphi 0, %s81
      %s96 = sphi 0, %s82
      %s100 = sphi 0, %s100
      %s102 = sphi 0, %s100
      %s103 = sphi 0, %s102
      %s117 = sphi 0, %s103
      %s121 = sphi 0, %s121
      %s123 = sphi 0, %s121
      %s124 = sphi 0, %s123
      %s138 = sphi 0, %s124
      %s144 = sphi 0, %s146
      %s147 = sphi 0, %s144
      %s148 = sphi 0, %s147
      %s164 = sphi 0, %s148
      %s170 = sphi 0, %s172
      %s173 = sphi 0, %s170
      %s174 = sphi 0, %s173
      %s190 = sphi 0, %s174
      %s196 = sphi 0, %s198
      %s199 = sphi 0, %s196
      %s200 = sphi 0, %s199
      %s216 = sphi 0, %s200
    $region4: #{tpu_custom_call.1} parent=1 // loop_header_branch
      %27 = sbr.rel (%p25) target = $region8
    $region5: #{tpu_custom_call.1} parent=1 // loop_body
      %s29 = ssub.s32 %s24, 1
      %s30 = ssub.s32 %s24, 2
      %s31 = sadd.s32 %s24, 1
      %s32 = ssub.s32 %s24, %s31
      %p33 = scmp.eq.s32.totalorder %s32, 0
      %s35 = sadd.s32 %s34, 1
      %s36 = scalar_select %p33, %s34, %s35
      %p39 = pneg %p33
      %p40 = scmp.eq.s32.totalorder %s24, 2
      %p41 = por %p39, %p40
      %p42 = scmp.ne.s32.totalorder %s34, %s37
      %p43 = scmp.eq.s32.totalorder %s24, 0
      %p44 = por %p42, %p43
      %p45 = scmp.ne.s32.totalorder %s34, %s37
      %p46 = scmp.eq.s32.totalorder %s29, 2
      %p47 = por %p45, %p46
      %p48 = scmp.ne.s32.totalorder %s37, %s38
      %p49 = scmp.eq.s32.totalorder %s29, 0
      %p50 = por %p48, %p49
      %p51 = scmp.ne.s32.totalorder %s37, %s38
      %p52 = scmp.eq.s32.totalorder %s30, 2
      %p53 = por %p51, %p52
      %p55 = scmp.ne.s32.totalorder %s38, %s54
      %p56 = scmp.eq.s32.totalorder %s30, 0
      %p57 = por %p55, %p56
      %s59 = sadd.s32 %s58, 1
      %p62 = scmp.eq.s32.totalorder %s24, 2
      %p63 = scmp.ne.s32.totalorder %s58, %s60
      %p64 = scmp.eq.s32.totalorder %s24, 0
      %p65 = por %p63, %p64
      %p66 = scmp.ne.s32.totalorder %s58, %s60
      %p67 = scmp.eq.s32.totalorder %s29, 2
      %p68 = por %p66, %p67
      %p69 = scmp.ne.s32.totalorder %s60, %s61
      %p70 = scmp.eq.s32.totalorder %s29, 0
      %p71 = por %p69, %p70
      %p72 = scmp.ne.s32.totalorder %s60, %s61
      %p73 = scmp.eq.s32.totalorder %s30, 2
      %p74 = por %p72, %p73
      %p76 = scmp.ne.s32.totalorder %s61, %s75
      %p77 = scmp.eq.s32.totalorder %s30, 0
      %p78 = por %p76, %p77
      %s80 = sadd.s32 %s79, 1
      %p83 = scmp.eq.s32.totalorder %s24, 2
      %p84 = scmp.ne.s32.totalorder %s79, %s81
      %p85 = scmp.eq.s32.totalorder %s24, 0
      %p86 = por %p84, %p85
      %p87 = scmp.ne.s32.totalorder %s79, %s81
      %p88 = scmp.eq.s32.totalorder %s29, 2
      %p89 = por %p87, %p88
      %p90 = scmp.ne.s32.totalorder %s81, %s82
      %p91 = scmp.eq.s32.totalorder %s29, 0
      %p92 = por %p90, %p91
      %p93 = scmp.ne.s32.totalorder %s81, %s82
      %p94 = scmp.eq.s32.totalorder %s30, 2
      %p95 = por %p93, %p94
      %p97 = scmp.ne.s32.totalorder %s82, %s96
      %p98 = scmp.eq.s32.totalorder %s30, 0
      %p99 = por %p97, %p98
      %s101 = sadd.s32 %s100, 1
      %p104 = scmp.eq.s32.totalorder %s24, 2
      %p105 = scmp.ne.s32.totalorder %s100, %s102
      %p106 = scmp.eq.s32.totalorder %s24, 0
      %p107 = por %p105, %p106
      %p108 = scmp.ne.s32.totalorder %s100, %s102
      %p109 = scmp.eq.s32.totalorder %s29, 2
      %p110 = por %p108, %p109
      %p111 = scmp.ne.s32.totalorder %s102, %s103
      %p112 = scmp.eq.s32.totalorder %s29, 0
      %p113 = por %p111, %p112
      %p114 = scmp.ne.s32.totalorder %s102, %s103
      %p115 = scmp.eq.s32.totalorder %s30, 2
      %p116 = por %p114, %p115
      %p118 = scmp.ne.s32.totalorder %s103, %s117
      %p119 = scmp.eq.s32.totalorder %s30, 0
      %p120 = por %p118, %p119
      %s122 = sadd.s32 %s121, 1
      %p125 = scmp.eq.s32.totalorder %s24, 2
      %p126 = scmp.ne.s32.totalorder %s121, %s123
      %p127 = scmp.eq.s32.totalorder %s24, 0
      %p128 = por %p126, %p127
      %p129 = scmp.ne.s32.totalorder %s121, %s123
      %p130 = scmp.eq.s32.totalorder %s29, 2
      %p131 = por %p129, %p130
      %p132 = scmp.ne.s32.totalorder %s123, %s124
      %p133 = scmp.eq.s32.totalorder %s29, 0
      %p134 = por %p132, %p133
      %p135 = scmp.ne.s32.totalorder %s123, %s124
      %p136 = scmp.eq.s32.totalorder %s30, 2
      %p137 = por %p135, %p136
      %p139 = scmp.ne.s32.totalorder %s124, %s138
      %p140 = scmp.eq.s32.totalorder %s30, 0
      %p141 = por %p139, %p140
      %s142 = ssub.s32 %s24, %s31
      %p143 = scmp.eq.s32.totalorder %s142, 0
      %s145 = sadd.s32 %s144, 1
      %s146 = scalar_select %p143, %s144, %s145
      %p149 = pneg %p143
      %p150 = scmp.eq.s32.totalorder %s24, 2
      %p151 = por %p149, %p150
      %p152 = scmp.ne.s32.totalorder %s144, %s147
      %p153 = scmp.eq.s32.totalorder %s24, 0
      %p154 = por %p152, %p153
      %p155 = scmp.ne.s32.totalorder %s144, %s147
      %p156 = scmp.eq.s32.totalorder %s29, 2
      %p157 = por %p155, %p156
      %p158 = scmp.ne.s32.totalorder %s147, %s148
      %p159 = scmp.eq.s32.totalorder %s29, 0
      %p160 = por %p158, %p159
      %p161 = scmp.ne.s32.totalorder %s147, %s148
      %p162 = scmp.eq.s32.totalorder %s30, 2
      %p163 = por %p161, %p162
      %p165 = scmp.ne.s32.totalorder %s148, %s164
      %p166 = scmp.eq.s32.totalorder %s30, 0
      %p167 = por %p165, %p166
      %s168 = ssub.s32 %s24, %s31
      %p169 = scmp.eq.s32.totalorder %s168, 0
      %s171 = sadd.s32 %s170, 1
      %s172 = scalar_select %p169, %s170, %s171
      %p175 = pneg %p169
      %p176 = scmp.eq.s32.totalorder %s24, 2
      %p177 = por %p175, %p176
      %p178 = scmp.ne.s32.totalorder %s170, %s173
      %p179 = scmp.eq.s32.totalorder %s24, 0
      %p180 = por %p178, %p179
      %p181 = scmp.ne.s32.totalorder %s170, %s173
      %p182 = scmp.eq.s32.totalorder %s29, 2
      %p183 = por %p181, %p182
      %p184 = scmp.ne.s32.totalorder %s173, %s174
      %p185 = scmp.eq.s32.totalorder %s29, 0
      %p186 = por %p184, %p185
      %p187 = scmp.ne.s32.totalorder %s173, %s174
      %p188 = scmp.eq.s32.totalorder %s30, 2
      %p189 = por %p187, %p188
      %p191 = scmp.ne.s32.totalorder %s174, %s190
      %p192 = scmp.eq.s32.totalorder %s30, 0
      %p193 = por %p191, %p192
      %s194 = ssub.s32 %s24, %s31
      %p195 = scmp.eq.s32.totalorder %s194, 0
      %s197 = sadd.s32 %s196, 1
      %s198 = scalar_select %p195, %s196, %s197
      %p201 = pneg %p195
      %p202 = scmp.eq.s32.totalorder %s24, 2
      %p203 = por %p201, %p202
      %p204 = scmp.ne.s32.totalorder %s196, %s199
      %p205 = scmp.eq.s32.totalorder %s24, 0
      %p206 = por %p204, %p205
      %p207 = scmp.ne.s32.totalorder %s196, %s199
      %p208 = scmp.eq.s32.totalorder %s29, 2
      %p209 = por %p207, %p208
      %p210 = scmp.ne.s32.totalorder %s199, %s200
      %p211 = scmp.eq.s32.totalorder %s29, 0
      %p212 = por %p210, %p211
      %p213 = scmp.ne.s32.totalorder %s199, %s200
      %p214 = scmp.eq.s32.totalorder %s30, 2
      %p215 = por %p213, %p214
      %p217 = scmp.ne.s32.totalorder %s200, %s216
      %p218 = scmp.eq.s32.totalorder %s30, 0
      %p219 = por %p217, %p218
      %p220 = scmp.le.s32.totalorder 1, %s24
      %p221 = scmp.lt.s32.totalorder %s24, 4
      %p222 = pnand %p220, %p221
      %p223 = pneg %p222
      // Predicated region
      $region9: #{tpu_custom_call.1} parent=5 // pred_check
        _
      $region10: #{tpu_custom_call.1} parent=5 // pred_check_branch
        %225 = sbr.rel (%p222) target = $region12
      $region11: #{tpu_custom_call.1} parent=5 // pred_region
        %s226 = ssub.s32 %s24, 1
        // Predicated region
        $region13: #{tpu_custom_call.1} parent=11 // pred_check
          %p227 = pneg %p71
        $region14: #{tpu_custom_call.1} parent=11 // pred_check_branch
          %229 = sbr.rel (%p227) target = $region16
        $region15: #{tpu_custom_call.1} parent=11 // pred_region
          _
        $region16: #{tpu_custom_call.1} parent=11 // pred_fallthru
          _
        // Predicated region
        $region17: #{tpu_custom_call.1} parent=11 // pred_check
          %p230 = pneg %p92
        $region18: #{tpu_custom_call.1} parent=11 // pred_check_branch
          %232 = sbr.rel (%p230) target = $region20
        $region19: #{tpu_custom_call.1} parent=11 // pred_region
          _
        $region20: #{tpu_custom_call.1} parent=11 // pred_fallthru
          _
        // Predicated region
        $region21: #{tpu_custom_call.1} parent=11 // pred_check
          %p233 = pneg %p113
        $region22: #{tpu_custom_call.1} parent=11 // pred_check_branch
          %235 = sbr.rel (%p233) target = $region24
        $region23: #{tpu_custom_call.1} parent=11 // pred_region
          %237 = vsyncadd [#allocation6], 0
          %s239 = sshll.u32 %s3, 4
          %s240 = int_to_ptr.hbm [resolvable:$true] %s239
          %s241 = sshll.u32 [#allocation5], 4
          %s242 = int_to_ptr.vmem [resolvable:$true] %s241
          %244 = dma.hbm_to_vmem [thread:$0]  %s240, 48, %s242, [#allocation6]
        $region24: #{tpu_custom_call.1} parent=11 // pred_fallthru
          _
        // Predicated region
        $region25: #{tpu_custom_call.1} parent=11 // pred_check
          %p245 = pneg %p134
        $region26: #{tpu_custom_call.1} parent=11 // pred_check_branch
          %247 = sbr.rel (%p245) target = $region28
        $region27: #{tpu_custom_call.1} parent=11 // pred_region
          %249 = vsyncadd [#allocation6], 0
          %s251 = sshll.u32 %s4, 4
          %s252 = int_to_ptr.hbm [resolvable:$true] %s251
          %s253 = sshll.u32 [#allocation7], 4
          %s254 = int_to_ptr.vmem [resolvable:$true] %s253
          %256 = dma.hbm_to_vmem [thread:$0]  %s252, 48, %s254, [#allocation6]
        $region28: #{tpu_custom_call.1} parent=11 // pred_fallthru
          _
      $region12: #{tpu_custom_call.1} parent=5 // pred_fallthru
        _
      %p257 = scmp.lt.s32.totalorder %s24, 3
      // Predicated region
      $region29: #{tpu_custom_call.1} parent=5 // pred_check
        %p258 = pneg %p257
      $region30: #{tpu_custom_call.1} parent=5 // pred_check_branch
        %260 = sbr.rel (%p258) target = $region32
      $region31: #{tpu_custom_call.1} parent=5 // pred_region
        // Predicated region
        $region33: #{tpu_custom_call.1} parent=31 // pred_check
          %p261 = pneg %p44
        $region34: #{tpu_custom_call.1} parent=31 // pred_check_branch
          %263 = sbr.rel (%p261) target = $region36
        $region35: #{tpu_custom_call.1} parent=31 // pred_region
          %s264 = sand.u32 %s34, 1
          %s265 = scalar_lea.sflag [#allocation3], %s264
          %s266 = sand.u32 %s34, 1
          %s267 = smul.addr %s266, 8
          %s268 = scalar_lea.vmem [#allocation2], %s267
          %270 = vsyncadd %s265, 0
          %s271 = smul.addr %s24, 8
          %s272 = scalar_lea.hbm %s0, %s271
          %s274 = sshll.u32 %s272, 4
          %s275 = int_to_ptr.hbm [resolvable:$true] %s274
          %s276 = sshll.u32 %s268, 4
          %s277 = int_to_ptr.vmem [resolvable:$true] %s276
          %279 = dma.hbm_to_vmem [thread:$0]  %s275, 128, %s277, %s265
        $region36: #{tpu_custom_call.1} parent=31 // pred_fallthru
          _
      $region32: #{tpu_custom_call.1} parent=5 // pred_fallthru
        _
      %p280 = scmp.le.s32.totalorder 1, %s24
      %p281 = scmp.lt.s32.totalorder %s24, 4
      %p282 = pnand %p280, %p281
      %p283 = pneg %p282
      // Predicated region
      $region37: #{tpu_custom_call.1} parent=5 // pred_check
        _
      $region38: #{tpu_custom_call.1} parent=5 // pred_check_branch
        %285 = sbr.rel (%p282) target = $region40
      $region39: #{tpu_custom_call.1} parent=5 // pred_region
        %s286 = ssub.s32 %s24, 1
        %s287 = sand.u32 %s37, 1
        %s288 = scalar_lea.sflag [#allocation3], %s287
        %s289 = sand.u32 %s37, 1
        %s290 = smul.addr %s289, 8
        %s291 = scalar_lea.vmem [#allocation2], %s290
        // Predicated region
        $region41: #{tpu_custom_call.1} parent=39 // pred_check
          %p292 = pneg %p50
        $region42: #{tpu_custom_call.1} parent=39 // pred_check_branch
          %294 = sbr.rel (%p292) target = $region44
        $region43: #{tpu_custom_call.1} parent=39 // pred_region
          %296 = dma.done %s288, 128
        $region44: #{tpu_custom_call.1} parent=39 // pred_fallthru
          _
        // Predicated region
        $region45: #{tpu_custom_call.1} parent=39 // pred_check
          %p297 = pneg %p113
        $region46: #{tpu_custom_call.1} parent=39 // pred_check_branch
          %299 = sbr.rel (%p297) target = $region48
        $region47: #{tpu_custom_call.1} parent=39 // pred_region
          %301 = dma.done [#allocation6], 48
        $region48: #{tpu_custom_call.1} parent=39 // pred_fallthru
          _
        // Predicated region
        $region49: #{tpu_custom_call.1} parent=39 // pred_check
          %p302 = pneg %p134
        $region50: #{tpu_custom_call.1} parent=39 // pred_check_branch
          %304 = sbr.rel (%p302) target = $region52
        $region51: #{tpu_custom_call.1} parent=39 // pred_region
          %306 = dma.done [#allocation6], 48
        $region52: #{tpu_custom_call.1} parent=39 // pred_fallthru
          _
        %s307 = sand.u32 %s37, 1
        %s308 = scalar_lea.sflag [#allocation3], %s307
        %s309 = sand.u32 %s37, 1
        %s310 = smul.addr %s309, 8
        %s311 = scalar_lea.vmem [#allocation2], %s310
        %p312 = pneg %p50
        %p313 = pneg %p47
        %p314 = pneg %p71
        %p315 = pneg %p68
        %p316 = pneg %p92
        %p317 = pneg %p89
        %p318 = pneg %p113
        %p319 = pneg %p110
        %p320 = pneg %p134
        %p321 = pneg %p131
        %p322 = pneg %p160
        %p323 = pneg %p157
        %s324 = sand.u32 %s147, 1
        %s325 = scalar_lea.sflag [#allocation4], %s324
        %s326 = sand.u32 %s147, 1
        %s327 = smul.addr %s326, 8
        %s328 = scalar_lea.vmem [#allocation8], %s327
        %p329 = pneg %p186
        %p330 = pneg %p183
        %s331 = sand.u32 %s29, 1
        %s332 = scalar_lea.sflag [#allocation10], %s331
        %s333 = sand.u32 %s173, 1
        %s334 = scalar_lea.vmem [#allocation9], %s333
        %p335 = pneg %p212
        %p336 = pneg %p209
        %s337 = sand.u32 %s29, 1
        %s338 = scalar_lea.sflag [#allocation10], %s337
        %s339 = sand.u32 %s199, 1
        %s340 = scalar_lea.vmem [#allocation11], %s339
        %s341 = smul.u32 %s29, 128
        %s342 = sshra.s32 %s341, 7
        %s343 = sand.u32 %s341, 127
        %s344 = scalar_lea.vmem %s1, %s342
        %v345 = vld [vmem:[%s344] sm:$0x1]
        %s346 = scalar_lea.vmem %s2, %s342
        %v347 = vld [vmem:[%s346] sm:$0x1]
        %s348 = scalar_lea.vmem [#allocation5], %s342
        %v349 = vld [vmem:[%s348] sm:$0x1]
        %s350 = scalar_lea.vmem [#allocation7], %s342
        %v351 = vld [vmem:[%s350] sm:$0x1]
        %v352 = vld [vmem:[%s291] sm:$0xff]
        %v353 = vrot.slane %v352, 4
        %v354 = vadd.f32 %v352, %v353
        %v355 = vrot.slane %v354, 2
        %v356 = vadd.f32 %v354, %v355
        %v357 = vrot.slane %v356, 1
        %v358 = vadd.f32 %v356, %v357
        %v359 = vrcp.pop 8.0
        %v360 = vmul.f32 8.0, %v359
        %v361 = vsub.f32 1.0, %v360
        %v362 = vmul.f32 %v359, %v361
        %v363 = vadd.f32 %v359, %v362
        %vm364 = vweird.f32 %v359
        %v365 = vsel %vm364, %v359, %v363
        %v366 = vmul.f32 %v358, %v365
        %v367 = vsub.f32 %v352, %v366
        %v368 = vmul.f32 %v367, %v367
        %v369 = vrot.slane %v368, 4
        %v370 = vadd.f32 %v368, %v369
        %v371 = vrot.slane %v370, 2
        %v372 = vadd.f32 %v370, %v371
        %v373 = vrot.slane %v372, 1
        %v374 = vadd.f32 %v372, %v373
        %v375 = vmul.f32 %v374, 0.14285715
        %v376 = vmul.f32 %v366, 0.9
        %v377 = vmul.f32 %v349, 0.1
        %v378 = vadd.f32 %v376, %v377
        %v379 = vmul.f32 %v375, 0.9
        %v380 = vmul.f32 %v351, 0.1
        %v381 = vadd.f32 %v379, %v380
        %382 = vst [vmem:[%s334] sm:$0x1] %v378
        %383 = vst [vmem:[%s340] sm:$0x1] %v381
        %v384 = vadd.f32 %v381, 1e-05
        %v385 = vrcp.pop %v384
        %v386 = vmul.f32 %v384, %v385
        %v387 = vsub.f32 2.0, %v386
        %v388 = vmul.f32 %v385, %v387
        %v389 = vmul.f32 %v345, %v388
        %v390 = vmul.f32 %v389, %v378
        %v391 = vsub.f32 %v347, %v390
        %v393 = vperm.slane %v389, 0
        %v395 = vmul.f32 %v352, %v393
        %v397 = vperm.slane %v391, 0
        %v399 = vadd.f32 %v395, %v397
        %400 = vst [vmem:[%s328] sm:$0xff] %v399
        %s401 = sand.u32 %s147, 1
        %s402 = scalar_lea.sflag [#allocation4], %s401
        %s403 = sand.u32 %s147, 1
        %s404 = smul.addr %s403, 8
        %s405 = scalar_lea.vmem [#allocation8], %s404
        %s406 = sand.u32 %s29, 1
        %s407 = scalar_lea.sflag [#allocation10], %s406
        %s408 = sand.u32 %s173, 1
        %s409 = scalar_lea.vmem [#allocation9], %s408
        %s410 = sand.u32 %s29, 1
        %s411 = scalar_lea.sflag [#allocation10], %s410
        %s412 = sand.u32 %s199, 1
        %s413 = scalar_lea.vmem [#allocation11], %s412
        // Predicated region
        $region53: #{tpu_custom_call.1} parent=39 // pred_check
          %p414 = pneg %p157
        $region54: #{tpu_custom_call.1} parent=39 // pred_check_branch
          %416 = sbr.rel (%p414) target = $region56
        $region55: #{tpu_custom_call.1} parent=39 // pred_region
          %418 = vsyncadd %s402, 0
          %s419 = smul.addr %s29, 8
          %s420 = scalar_lea.hbm %s5, %s419
          %s422 = sshll.u32 %s405, 4
          %s423 = int_to_ptr.vmem [resolvable:$true] %s422
          %s424 = sshll.u32 %s420, 4
          %s425 = int_to_ptr.hbm [resolvable:$true] %s424
          %427 = dma.vmem_to_hbm [thread:$0]  %s423, 128, %s425, %s402
        $region56: #{tpu_custom_call.1} parent=39 // pred_fallthru
          _
        // Predicated region
        $region57: #{tpu_custom_call.1} parent=39 // pred_check
          %p428 = pneg %p183
        $region58: #{tpu_custom_call.1} parent=39 // pred_check_branch
          %430 = sbr.rel (%p428) target = $region60
        $region59: #{tpu_custom_call.1} parent=39 // pred_region
          %432 = vsyncadd %s407, 0
          %s433 = scalar_lea.hbm %s6, %s29
          %s435 = sshll.u32 %s409, 4
          %s436 = int_to_ptr.vmem [resolvable:$true] %s435
          %s437 = sshll.u32 %s433, 4
          %s438 = int_to_ptr.hbm [resolvable:$true] %s437
          %440 = dma.vmem_to_hbm [thread:$0]  %s436, 16, %s438, %s407
        $region60: #{tpu_custom_call.1} parent=39 // pred_fallthru
          _
        // Predicated region
        $region61: #{tpu_custom_call.1} parent=39 // pred_check
          %p441 = pneg %p209
        $region62: #{tpu_custom_call.1} parent=39 // pred_check_branch
          %443 = sbr.rel (%p441) target = $region64
        $region63: #{tpu_custom_call.1} parent=39 // pred_region
          %445 = vsyncadd %s411, 0
          %s446 = scalar_lea.hbm %s7, %s29
          %s448 = sshll.u32 %s413, 4
          %s449 = int_to_ptr.vmem [resolvable:$true] %s448
          %s450 = sshll.u32 %s446, 4
          %s451 = int_to_ptr.hbm [resolvable:$true] %s450
          %453 = dma.vmem_to_hbm [thread:$0]  %s449, 16, %s451, %s411
        $region64: #{tpu_custom_call.1} parent=39 // pred_fallthru
          _
      $region40: #{tpu_custom_call.1} parent=5 // pred_fallthru
        _
      %p454 = scmp.le.s32.totalorder 2, %s24
      // Predicated region
      $region65: #{tpu_custom_call.1} parent=5 // pred_check
        %p455 = pneg %p454
      $region66: #{tpu_custom_call.1} parent=5 // pred_check_branch
        %457 = sbr.rel (%p455) target = $region68
      $region67: #{tpu_custom_call.1} parent=5 // pred_region
        %s458 = ssub.s32 %s24, 2
        // Predicated region
        $region69: #{tpu_custom_call.1} parent=67 // pred_check
          %p459 = pneg %p163
        $region70: #{tpu_custom_call.1} parent=67 // pred_check_branch
          %461 = sbr.rel (%p459) target = $region72
        $region71: #{tpu_custom_call.1} parent=67 // pred_region
          %s462 = sand.u32 %s148, 1
          %s463 = scalar_lea.sflag [#allocation4], %s462
          %s464 = sand.u32 %s148, 1
          %s465 = smul.addr %s464, 8
          %s466 = scalar_lea.vmem [#allocation8], %s465
          %468 = dma.done %s463, 128
        $region72: #{tpu_custom_call.1} parent=67 // pred_fallthru
          _
        // Predicated region
        $region73: #{tpu_custom_call.1} parent=67 // pred_check
          %p469 = pneg %p189
        $region74: #{tpu_custom_call.1} parent=67 // pred_check_branch
          %471 = sbr.rel (%p469) target = $region76
        $region75: #{tpu_custom_call.1} parent=67 // pred_region
          %s472 = sand.u32 %s30, 1
          %s473 = scalar_lea.sflag [#allocation10], %s472
          %s474 = sand.u32 %s174, 1
          %s475 = scalar_lea.vmem [#allocation9], %s474
          %477 = dma.done %s473, 16
        $region76: #{tpu_custom_call.1} parent=67 // pred_fallthru
          _
        // Predicated region
        $region77: #{tpu_custom_call.1} parent=67 // pred_check
          %p478 = pneg %p215
        $region78: #{tpu_custom_call.1} parent=67 // pred_check_branch
          %480 = sbr.rel (%p478) target = $region80
        $region79: #{tpu_custom_call.1} parent=67 // pred_region
          %s481 = sand.u32 %s30, 1
          %s482 = scalar_lea.sflag [#allocation10], %s481
          %s483 = sand.u32 %s200, 1
          %s484 = scalar_lea.vmem [#allocation11], %s483
          %486 = dma.done %s482, 16
        $region80: #{tpu_custom_call.1} parent=67 // pred_fallthru
          _
      $region68: #{tpu_custom_call.1} parent=5 // pred_fallthru
        _
    $region6: #{tpu_custom_call.1} parent=1 // loop_footer
      %s28 = sadd.s32 1, %s24
    $region7: #{tpu_custom_call.1} parent=1 // loop_footer_branch
      %23 = sbr.rel target = $region3
    $region8: #{tpu_custom_call.1} parent=1 // loop_exit
      _
    %487 = vsyncpa [#allocation3], 1
    %s488 = scalar_lea.sflag [#allocation3], 1
    %489 = vsyncpa %s488, 1
    %490 = vsyncpa [#allocation6], 1
    %491 = vsyncpa [#allocation4], 1
    %s492 = scalar_lea.sflag [#allocation4], 1
    %493 = vsyncpa %s492, 1
    %494 = vsyncpa [#allocation10], 1
    %s495 = scalar_lea.sflag [#allocation10], 1
    %496 = vsyncpa %s495, 1

</llo_original>
